<compile_context>
chip_gen: v6e
topology: v6e:2x2x1
jax: 0.10.0
libtpu: 0.0.40
codegen_flags: <defaults>
</compile_context>

<pallas_src>
import numpy as np
import jax
import jax.numpy as jnp
from jax.experimental import pallas as pl
from jax.experimental.pallas import tpu as pltpu

_LANE = 128
_SUBLANE = 8
_MAX_TILE_ROWS = 4096  # 4096 x 128 x 4 B = 2 MiB per f32 tile


def _pwl_kernel(x_pts_ref, slopes_ref, c_ref, x_ref, o_ref):
    """One grid step = one (tile_r, 128) tile; all segments fused in-body.

    x_pts_ref  : (S+1,) SMEM breakpoints (strictly increasing)
    slopes_ref : (S,)   SMEM segment slopes
    c_ref      : (1,)   SMEM constant C = y0 - sum_i slope_i * x_i
    x_ref      : (tile_r, 128) VMEM input tile
    o_ref      : (tile_r, 128) VMEM output tile

    Uses relu(x-lo) - relu(x-hi) == clip(x, lo, hi) - lo, with the -lo terms
    pre-folded into C, so the per-segment work is max + min + mul + add.
    """
    xv = x_ref[...]
    acc = jnp.full_like(xv, c_ref[0])
    num_segments = slopes_ref.shape[0]  # static -> unrolled Python loop
    for i in range(num_segments):
        k = slopes_ref[i]
        lo = x_pts_ref[i]
        hi = x_pts_ref[i + 1]
        acc = acc + k * jnp.minimum(jnp.maximum(xv, lo), hi)
    o_ref[...] = acc


def fixed_width_relu_forward(x, x_points, y_points):
    """Pallas implementation of FixedWidthReluNetwork.forward (float32 out)."""
    xp_np = np.asarray(x_points, dtype=np.float32)
    yp_np = np.asarray(y_points, dtype=np.float32)
    if not np.all(np.diff(xp_np) > 0):
        # Clamp rewrite needs ascending breakpoints; duplicates would also be
        # a divide-by-zero in the PyTorch module's slope computation.
        raise ValueError("x_points must be strictly increasing")

    x_points = jnp.asarray(xp_np)
    y_points = jnp.asarray(yp_np)
    # calculate_slopes(): (y_{i+1}-y_i) / (x_{i+1}-x_i)
    slopes = (y_points[1:] - y_points[:-1]) / (x_points[1:] - x_points[:-1])
    # f(x) = y0 + sum_i k_i*(clip(x,lo_i,hi_i) - lo_i)
    #      = (y0 - sum_i k_i*lo_i) + sum_i k_i*clip(x,lo_i,hi_i)
    c0 = (y_points[0] - jnp.sum(slopes * x_points[:-1])).reshape((1,))

    orig_shape = x.shape
    x = x.astype(jnp.float32)
    total = x.size
    flat = x.reshape(-1)

    # Lane-dense (rows, 128) slab. Only pad (a full HBM read+write) when the
    # size is not already a multiple of the (8,128) = 1024-element vreg tile.
    aligned = (total % (_LANE * _SUBLANE) == 0)
    if aligned:
        rows = total // _LANE
    else:
        rows = -(-total // _LANE)                 # ceil to full 128-lane rows
        rows = -(-rows // _SUBLANE) * _SUBLANE    # ceil to sublane multiple
        flat = jnp.pad(flat, (0, rows * _LANE - total))
    x2d = flat.reshape(rows, _LANE)

    tile_r = min(rows, _MAX_TILE_ROWS)            # rows is a multiple of 8 (or == tile_r)
    grid = (pl.cdiv(rows, tile_r),)               # partial last tile masked by Pallas

    out2d = pl.pallas_call(
        _pwl_kernel,
        out_shape=jax.ShapeDtypeStruct((rows, _LANE), jnp.float32),
        grid=grid,
        in_specs=[
            pl.BlockSpec(memory_space=pltpu.SMEM),               # x_points
            pl.BlockSpec(memory_space=pltpu.SMEM),               # slopes
            pl.BlockSpec(memory_space=pltpu.SMEM),               # C scalar
            pl.BlockSpec((tile_r, _LANE), lambda r: (r, 0)),     # x tile
        ],
        out_specs=pl.BlockSpec((tile_r, _LANE), lambda r: (r, 0)),
        compiler_params=pltpu.CompilerParams(
            dimension_semantics=("parallel",)),
    )(x_points, slopes, c0, x2d)

    if aligned:
        return out2d.reshape(orig_shape)
    return out2d.reshape(-1)[:total].reshape(orig_shape)


def _reference_forward(x, x_points, y_points):
    """Pure-JAX reference mirroring the PyTorch module, for verification."""
    x_points = jnp.asarray(x_points, dtype=jnp.float32)
    y_points = jnp.asarray(y_points, dtype=jnp.float32)
    slopes = (y_points[1:] - y_points[:-1]) / (x_points[1:] - x_points[:-1])
    f = jnp.full_like(x, y_points[0])
    for i in range(slopes.shape[0]):
        f = f + slopes[i] * (jnp.maximum(x - x_points[i], 0.0)
                             - jnp.maximum(x - x_points[i + 1], 0.0))
    return f


if __name__ == "__main__":
    # Deterministic parameters (module __init__ takes breakpoint lists).
    x_points = [-2.0, -1.0, 0.0, 1.0, 2.0]   # 5 breakpoints -> 4 segments
    y_points = [0.0, 1.0, -1.0, 2.0, 0.5]

    key = jax.random.PRNGKey(0)
    k0, k1 = jax.random.split(key)

    # Aligned case (total = 2048, multiple of 1024 -> no pad, no output slice).
    x = jax.random.normal(k0, (2, 4, 16, 16), dtype=jnp.float32) * 2.0
    out = fixed_width_relu_forward(x, x_points, y_points)
    jax.block_until_ready(out)
    ref = _reference_forward(x, x_points, y_points)
    assert out.shape == x.shape and out.dtype == jnp.float32
    assert jnp.allclose(out, ref, atol=1e-5, rtol=1e-5)

    # Unaligned case (total = 945) exercising the pad / de-pad path.
    x_odd = jax.random.normal(k1, (3, 5, 7, 9), dtype=jnp.float32) * 2.0
    out_odd = fixed_width_relu_forward(x_odd, x_points, y_points)
    jax.block_until_ready(out_odd)
    ref_odd = _reference_forward(x_odd, x_points, y_points)
    assert out_odd.shape == x_odd.shape
    assert jnp.allclose(out_odd, ref_odd, atol=1e-5, rtol=1e-5)

    print("KERNEL_OK")
</pallas_src>

<mosaic_0001>
module attributes {stable_mosaic.version = 11 : i64} {
  func.func @_pwl_kernel(%arg0: i32, %arg1: memref<5xf32, #tpu.memory_space<smem>>, %arg2: memref<4xf32, #tpu.memory_space<smem>>, %arg3: memref<1xf32, #tpu.memory_space<smem>>, %arg4: memref<16x128xf32, #tpu.memory_space<vmem>>, %arg5: memref<16x128xf32, #tpu.memory_space<vmem>>) attributes {dimension_semantics = [#tpu.dimension_semantics<parallel>], iteration_bounds = array<i64: 1>, scalar_prefetch = 0 : i64, scratch_operands = 0 : i64, tpu.core_type = #tpu.core_type<tc>, window_params = [{transform_indices = @transform_0, window_bounds = array<i64: 5>}, {transform_indices = @transform_1, window_bounds = array<i64: 4>}, {transform_indices = @transform_2, window_bounds = array<i64: 1>}, {transform_indices = @transform_3, window_bounds = array<i64: 16, 128>}, {transform_indices = @transform_4, window_bounds = array<i64: 16, 128>}]} {
    %c0 = arith.constant 0 : index
    %c0_0 = arith.constant 0 : index
    %0 = vector.load %arg4[%c0, %c0_0] : memref<16x128xf32, #tpu.memory_space<vmem>>, vector<16x128xf32>
    %c0_1 = arith.constant 0 : index
    %1 = memref.load %arg3[%c0_1] : memref<1xf32, #tpu.memory_space<smem>>
    %2 = vector.broadcast %1 : f32 to vector<16x128xf32>
    %c0_2 = arith.constant 0 : index
    %3 = memref.load %arg2[%c0_2] : memref<4xf32, #tpu.memory_space<smem>>
    %c0_3 = arith.constant 0 : index
    %4 = memref.load %arg1[%c0_3] : memref<5xf32, #tpu.memory_space<smem>>
    %c1 = arith.constant 1 : index
    %5 = memref.load %arg1[%c1] : memref<5xf32, #tpu.memory_space<smem>>
    %6 = vector.broadcast %4 : f32 to vector<16x128xf32>
    %7 = arith.maximumf %0, %6 : vector<16x128xf32>
    %8 = vector.broadcast %5 : f32 to vector<16x128xf32>
    %9 = arith.minimumf %7, %8 : vector<16x128xf32>
    %10 = vector.broadcast %3 : f32 to vector<16x128xf32>
    %11 = arith.mulf %10, %9 : vector<16x128xf32>
    %12 = arith.addf %2, %11 : vector<16x128xf32>
    %c1_4 = arith.constant 1 : index
    %13 = memref.load %arg2[%c1_4] : memref<4xf32, #tpu.memory_space<smem>>
    %c1_5 = arith.constant 1 : index
    %14 = memref.load %arg1[%c1_5] : memref<5xf32, #tpu.memory_space<smem>>
    %c2 = arith.constant 2 : index
    %15 = memref.load %arg1[%c2] : memref<5xf32, #tpu.memory_space<smem>>
    %16 = vector.broadcast %14 : f32 to vector<16x128xf32>
    %17 = arith.maximumf %0, %16 : vector<16x128xf32>
    %18 = vector.broadcast %15 : f32 to vector<16x128xf32>
    %19 = arith.minimumf %17, %18 : vector<16x128xf32>
    %20 = vector.broadcast %13 : f32 to vector<16x128xf32>
    %21 = arith.mulf %20, %19 : vector<16x128xf32>
    %22 = arith.addf %12, %21 : vector<16x128xf32>
    %c2_6 = arith.constant 2 : index
    %23 = memref.load %arg2[%c2_6] : memref<4xf32, #tpu.memory_space<smem>>
    %c2_7 = arith.constant 2 : index
    %24 = memref.load %arg1[%c2_7] : memref<5xf32, #tpu.memory_space<smem>>
    %c3 = arith.constant 3 : index
    %25 = memref.load %arg1[%c3] : memref<5xf32, #tpu.memory_space<smem>>
    %26 = vector.broadcast %24 : f32 to vector<16x128xf32>
    %27 = arith.maximumf %0, %26 : vector<16x128xf32>
    %28 = vector.broadcast %25 : f32 to vector<16x128xf32>
    %29 = arith.minimumf %27, %28 : vector<16x128xf32>
    %30 = vector.broadcast %23 : f32 to vector<16x128xf32>
    %31 = arith.mulf %30, %29 : vector<16x128xf32>
    %32 = arith.addf %22, %31 : vector<16x128xf32>
    %c3_8 = arith.constant 3 : index
    %33 = memref.load %arg2[%c3_8] : memref<4xf32, #tpu.memory_space<smem>>
    %c3_9 = arith.constant 3 : index
    %34 = memref.load %arg1[%c3_9] : memref<5xf32, #tpu.memory_space<smem>>
    %c4 = arith.constant 4 : index
    %35 = memref.load %arg1[%c4] : memref<5xf32, #tpu.memory_space<smem>>
    %36 = vector.broadcast %34 : f32 to vector<16x128xf32>
    %37 = arith.maximumf %0, %36 : vector<16x128xf32>
    %38 = vector.broadcast %35 : f32 to vector<16x128xf32>
    %39 = arith.minimumf %37, %38 : vector<16x128xf32>
    %40 = vector.broadcast %33 : f32 to vector<16x128xf32>
    %41 = arith.mulf %40, %39 : vector<16x128xf32>
    %42 = arith.addf %32, %41 : vector<16x128xf32>
    %c0_10 = arith.constant 0 : index
    %c0_11 = arith.constant 0 : index
    %43 = vector.load %arg5[%c0_10, %c0_11] : memref<16x128xf32, #tpu.memory_space<vmem>>, vector<16x128xf32>
    tpu.vector_store %arg5[%c0_10, %c0_11], %42 {strides = array<i32>} : memref<16x128xf32, #tpu.memory_space<vmem>>, vector<16x128xf32>,
    return
  }
  func.func @transform_0(%arg0: i32) -> i32 {
    %c0_i32 = arith.constant 0 : i32
    %c0_i32_0 = arith.constant 0 : i32
    return %c0_i32 : i32
  }
  func.func @transform_1(%arg0: i32) -> i32 {
    %c0_i32 = arith.constant 0 : i32
    %c0_i32_0 = arith.constant 0 : i32
    return %c0_i32 : i32
  }
  func.func @transform_2(%arg0: i32) -> i32 {
    %c0_i32 = arith.constant 0 : i32
    %c0_i32_0 = arith.constant 0 : i32
    return %c0_i32 : i32
  }
  func.func @transform_3(%arg0: i32) -> (i32, i32) {
    %c0_i32 = arith.constant 0 : i32
    %c0_i32_0 = arith.constant 0 : i32
    return %arg0, %c0_i32 : i32, i32
  }
  func.func @transform_4(%arg0: i32) -> (i32, i32) {
    %c0_i32 = arith.constant 0 : i32
    %c0_i32_0 = arith.constant 0 : i32
    return %arg0, %c0_i32 : i32, i32
  }
}

</mosaic_0001>

<llo_original>
// kernel: tpu_custom_call.1
$region0: #{tpu_custom_call.1}
  #allocation0 [shape = 'u32[]', space=smem, size = 0x4, offset = 0x4, fixed_abs, tag = 'smem constant byte address 0x4 - core index']
  #allocation1 [shape = 'u32[144,128]{1,0:T(1,128)}', space=vmem, size = 0x12000, scoped, tag = 'internal scratch']
  #allocation2 [shape = 'f32[1]{0:T(128)S(6)}', space=smem, size = 0x200, scoped, tag = 'scoped memory for tpu_custom_call.1']
  %s0 = inlined_call_operand.vmem [shape: f32[5], index: 0, kind: input, shape index: {}]
  %s1 = inlined_call_operand.vmem [shape: f32[4], index: 1, kind: input, shape index: {}]
  %s2 = inlined_call_operand.<no memory space> [shape: f32[1], index: 2, kind: input, shape index: {}]
  %s3 = inlined_call_operand.hbm [shape: f32[16,128], index: 3, kind: input, shape index: {}]
  %s4 = inlined_call_operand.hbm [shape: f32[16,128], index: 4, kind: output, shape index: {}]
  %s5 = sld [smem:[#allocation0]]
  $region38: #{tpu_custom_call.1} parent=0
    _
  %s7 = ssub.s32 1, %s5
  %s8 = scalar_select 0, %s7, %s5
  %9 = sst [smem:[#allocation2]] %s2
  $region1: #{tpu_custom_call.1} parent=0
    #allocation3 [shape = 'u8[512]{0}', space=smem, size = 0x200, scoped, tag = 'input window, operand 0, single buffered']
    #allocation4 [shape = 's32[1]{0}', space=sflag, size = 0x4, scoped, tag = 'scoped memory for tpu_custom_call.1']
    #allocation5 [shape = 's32[1]{0}', space=sflag, size = 0x4, scoped, tag = 'scoped memory for tpu_custom_call.1']
    #allocation6 [shape = 's32[1]{0}', space=sflag, size = 0x4, scoped, tag = 'scoped memory for tpu_custom_call.1']
    #allocation7 [shape = 'u8[512]{0}', space=smem, size = 0x200, scoped, tag = 'input window, operand 1, single buffered']
    #allocation8 [shape = 's32[1]{0}', space=sflag, size = 0x4, scoped, tag = 'scoped memory for tpu_custom_call.1']
    #allocation9 [shape = 'u8[8192]{0}', space=vmem, size = 0x2000, scoped, tag = 'input window, operand 3, single buffered']
    #allocation10 [shape = 'u8[8192]{0}', space=vmem, size = 0x2000, scoped, tag = 'output window, operand 0, single buffered']
    %10 = vsyncpa [#allocation6], 0
    %11 = vsyncpa [#allocation8], 0
    %12 = vsyncpa [#allocation4], 0
    %13 = vsyncpa [#allocation5], 0
    // Predicated region
    $region2: #{tpu_custom_call.1} parent=1 // pred_check
      _
    $region3: #{tpu_custom_call.1} parent=1 // pred_check_branch
      %15 = sbr.rel (0) target = $region5
    $region4: #{tpu_custom_call.1} parent=1 // pred_region
      %s17 = ssub.s32 16, 16
      %18 = vsyncadd [#allocation6], %s17
      %s20 = sshll.u32 %s0, 4
      %s21 = int_to_ptr.vmem [resolvable:$true] %s20
      %23 = dma.vmem_to_smem %s21, 16, [#allocation3], [#allocation6]
    $region5: #{tpu_custom_call.1} parent=1 // pred_fallthru
      _
    // Predicated region
    $region6: #{tpu_custom_call.1} parent=1 // pred_check
      _
    $region7: #{tpu_custom_call.1} parent=1 // pred_check_branch
      %25 = sbr.rel (0) target = $region9
    $region8: #{tpu_custom_call.1} parent=1 // pred_region
      %s27 = ssub.s32 16, 16
      %28 = vsyncadd [#allocation8], %s27
      %s30 = sshll.u32 %s1, 4
      %s31 = int_to_ptr.vmem [resolvable:$true] %s30
      %33 = dma.vmem_to_smem %s31, 16, [#allocation7], [#allocation8]
    $region9: #{tpu_custom_call.1} parent=1 // pred_fallthru
      _
    // Predicated region
    $region10: #{tpu_custom_call.1} parent=1 // pred_check
      _
    $region11: #{tpu_custom_call.1} parent=1 // pred_check_branch
      %35 = sbr.rel (0) target = $region13
    $region12: #{tpu_custom_call.1} parent=1 // pred_region
      _
    $region13: #{tpu_custom_call.1} parent=1 // pred_fallthru
      _
    // Predicated region
    $region14: #{tpu_custom_call.1} parent=1 // pred_check
      _
    $region15: #{tpu_custom_call.1} parent=1 // pred_check_branch
      %37 = sbr.rel (0) target = $region17
    $region16: #{tpu_custom_call.1} parent=1 // pred_region
      %s39 = ssub.s32 256, 256
      %40 = vsyncadd [#allocation4], %s39
      %s41 = sshll.u32 [#allocation9], 4
      %s42 = int_to_ptr.vmem [resolvable:$true] %s41
      %47 = dma.hbm_to_vmem [thread:$0]  %s3, 256, %s42, [#allocation4], 128, 128, 8
    $region17: #{tpu_custom_call.1} parent=1 // pred_fallthru
      _
    // Predicated region
    $region18: #{tpu_custom_call.1} parent=1 // pred_check
      _
    $region19: #{tpu_custom_call.1} parent=1 // pred_check_branch
      %49 = sbr.rel (0) target = $region21
    $region20: #{tpu_custom_call.1} parent=1 // pred_region
      %50 = dma.done [#allocation6], 16
    $region21: #{tpu_custom_call.1} parent=1 // pred_fallthru
      _
    // Predicated region
    $region22: #{tpu_custom_call.1} parent=1 // pred_check
      _
    $region23: #{tpu_custom_call.1} parent=1 // pred_check_branch
      %52 = sbr.rel (0) target = $region25
    $region24: #{tpu_custom_call.1} parent=1 // pred_region
      %53 = dma.done [#allocation8], 16
    $region25: #{tpu_custom_call.1} parent=1 // pred_fallthru
      _
    // Predicated region
    $region26: #{tpu_custom_call.1} parent=1 // pred_check
      _
    $region27: #{tpu_custom_call.1} parent=1 // pred_check_branch
      %55 = sbr.rel (0) target = $region29
    $region28: #{tpu_custom_call.1} parent=1 // pred_region
      %56 = dma.done [#allocation4], 256
    $region29: #{tpu_custom_call.1} parent=1 // pred_fallthru
      _
    %57 = sfence
    %v58 = vld [vmem:[#allocation9] sm:$0xff]
    %v59 = vld [vmem:[#allocation9 + $0x8] sm:$0xff]
    %s60 = sld [smem:[#allocation2]]
    %v61 = vstv %s60
    %s62 = sld [smem:[#allocation7]]
    %s63 = sld [smem:[#allocation3]]
    %s64 = sld [smem:[#allocation3 + $0x1]]
    %v65 = vstv %s63
    %v66 = vmax.f32 %v58, %v65
    %v67 = vmax.f32 %v59, %v65
    %v68 = vstv %s64
    %v69 = vmin.f32 %v66, %v68
    %v70 = vmin.f32 %v67, %v68
    %v71 = vstv %s62
    %v72 = vmul.f32 %v71, %v69
    %v73 = vmul.f32 %v71, %v70
    %v74 = vadd.f32 %v61, %v72
    %v75 = vadd.f32 %v61, %v73
    %s76 = sld [smem:[#allocation7 + $0x1]]
    %s77 = sld [smem:[#allocation3 + $0x2]]
    %v78 = vmax.f32 %v58, %v68
    %v79 = vmax.f32 %v59, %v68
    %v80 = vstv %s77
    %v81 = vmin.f32 %v78, %v80
    %v82 = vmin.f32 %v79, %v80
    %v83 = vstv %s76
    %v84 = vmul.f32 %v83, %v81
    %v85 = vmul.f32 %v83, %v82
    %v86 = vadd.f32 %v74, %v84
    %v87 = vadd.f32 %v75, %v85
    %s88 = sld [smem:[#allocation7 + $0x2]]
    %s89 = sld [smem:[#allocation3 + $0x3]]
    %v90 = vmax.f32 %v58, %v80
    %v91 = vmax.f32 %v59, %v80
    %v92 = vstv %s89
    %v93 = vmin.f32 %v90, %v92
    %v94 = vmin.f32 %v91, %v92
    %v95 = vstv %s88
    %v96 = vmul.f32 %v95, %v93
    %v97 = vmul.f32 %v95, %v94
    %v98 = vadd.f32 %v86, %v96
    %v99 = vadd.f32 %v87, %v97
    %s100 = sld [smem:[#allocation7 + $0x3]]
    %s101 = sld [smem:[#allocation3 + $0x4]]
    %v102 = vmax.f32 %v58, %v92
    %v103 = vmax.f32 %v59, %v92
    %v104 = vstv %s101
    %v105 = vmin.f32 %v102, %v104
    %v106 = vmin.f32 %v103, %v104
    %v107 = vstv %s100
    %v108 = vmul.f32 %v107, %v105
    %v109 = vmul.f32 %v107, %v106
    %v110 = vadd.f32 %v98, %v108
    %v111 = vadd.f32 %v99, %v109
    %112 = vst [vmem:[#allocation10] sm:$0xff] %v110
    %113 = vst [vmem:[#allocation10 + $0x8] sm:$0xff] %v111
    // Predicated region
    $region30: #{tpu_custom_call.1} parent=1 // pred_check
      _
    $region31: #{tpu_custom_call.1} parent=1 // pred_check_branch
      %115 = sbr.rel (0) target = $region33
    $region32: #{tpu_custom_call.1} parent=1 // pred_region
      %s117 = ssub.s32 256, 256
      %118 = vsyncadd [#allocation5], %s117
      %s119 = sshll.u32 [#allocation10], 4
      %s120 = int_to_ptr.vmem [resolvable:$true] %s119
      %125 = dma.vmem_to_hbm [thread:$0]  %s120, 256, %s4, [#allocation5], 128, 128, 8
    $region33: #{tpu_custom_call.1} parent=1 // pred_fallthru
      _
    // Predicated region
    $region34: #{tpu_custom_call.1} parent=1 // pred_check
      _
    $region35: #{tpu_custom_call.1} parent=1 // pred_check_branch
      %127 = sbr.rel (0) target = $region37
    $region36: #{tpu_custom_call.1} parent=1 // pred_region
      %128 = dma.done [#allocation5], 256
    $region37: #{tpu_custom_call.1} parent=1 // pred_fallthru
      _
    %129 = vsyncpa [#allocation4], 1
    %130 = vsyncpa [#allocation5], 1
    %131 = vsyncpa [#allocation6], 1
    %132 = vsyncpa [#allocation8], 1

</llo_original>
